<compile_context>
chip_gen: v7x
topology: tpu7x:2x2x1
jax: 0.10.0
libtpu: 0.0.40
codegen_flags: <defaults>
</compile_context>

<pallas_src>
import functools
import math

import jax
import jax.numpy as jnp
from jax.experimental import pallas as pl
from jax.experimental.pallas import tpu as pltpu

_HALF_LOG_2PI = 0.5 * math.log(2.0 * math.pi)
_LANES = 1024            # lane-dense last dim (large multiple of 128)
_MAX_BLOCK_ROWS = 256    # 256 x 1024 f32 = 1 MiB per block buffer


def _softplus(x):
    # numerically stable softplus (matches torch.nn.functional.softplus / jax.nn.softplus)
    return jnp.maximum(x, 0.0) + jnp.log1p(jnp.exp(-jnp.abs(x)))


def _stochastic_kernel(mean_ref, std_ref, eps_ref, act_ref, logp_ref, *, minimal_std):
    mean = mean_ref[...].astype(jnp.float32)
    std_raw = std_ref[...].astype(jnp.float32)
    eps = eps_ref[...].astype(jnp.float32)

    std = _softplus(std_raw) + minimal_std
    action = mean + std * eps            # rsample
    diff = action - mean                 # same rounding path as Normal.log_prob(rsample)
    t = jnp.tanh(action)

    # Normal.log_prob(action) - log(1 - t^2 + 1e-7), with the two logs fused into one.
    log_prob = (-(diff * diff) / (2.0 * std * std)
                - _HALF_LOG_2PI
                - jnp.log(std * (1.0 - t * t + 1e-7)))

    act_ref[...] = t.astype(act_ref.dtype)
    logp_ref[...] = log_prob.astype(logp_ref.dtype)


def _deterministic_kernel(mean_ref, act_ref, logp_ref):
    mean = mean_ref[...].astype(jnp.float32)
    t = jnp.tanh(mean)
    # torch path: log_prob = 1 (scalar, broadcast) minus the tanh volume correction.
    log_prob = 1.0 - jnp.log(1.0 - t * t + 1e-7)
    act_ref[...] = t.astype(act_ref.dtype)
    logp_ref[...] = log_prob.astype(logp_ref.dtype)


def _lane_dense(arrs):
    """Flatten each array and pad to a common lane-dense (rows, _LANES) slab."""
    n = arrs[0].size
    rows = max(1, pl.cdiv(n, _LANES))
    tb = min(_MAX_BLOCK_ROWS, rows)
    rows = pl.cdiv(rows, tb) * tb        # pad row count to a multiple of the block rows
    total = rows * _LANES
    out = []
    for a in arrs:
        flat = a.reshape(-1)
        if total != n:
            flat = jnp.pad(flat, (0, total - n))
        out.append(flat.reshape(rows, _LANES))
    return out, rows, tb


def tanh_gaussian_forward(mean, std, key=None, deterministic=False, minimal_std=0.001):
    """Pallas TanhGaussian forward. Returns (real_action, real_log_prob, stats)."""
    assert mean.shape == std.shape
    orig_shape = mean.shape
    n = mean.size
    out_dtype = mean.dtype

    if deterministic:
        # std (and eps) are dead in this path -> don't DMA them at all.
        (mean2d,), rows, tb = _lane_dense([mean])
        inputs = (mean2d,)
        kernel = _deterministic_kernel
        n_in = 1
    else:
        assert key is not None, "key is required for the stochastic path"
        # TODO(synk): eps could be drawn on-chip (pltpu.prng_seed + pltpu.stateful_normal)
        # to drop one full HBM read; kept as an input so the result is exactly
        # reproducible against the pure-JAX reference below.
        eps = jax.random.normal(key, orig_shape, dtype=out_dtype)
        (mean2d, std2d, eps2d), rows, tb = _lane_dense([mean, std, eps])
        inputs = (mean2d, std2d, eps2d)
        kernel = functools.partial(_stochastic_kernel, minimal_std=float(minimal_std))
        n_in = 3

    blk = pl.BlockSpec((tb, _LANES), lambda i: (i, 0))
    act2d, logp2d = pl.pallas_call(
        kernel,
        out_shape=(jax.ShapeDtypeStruct((rows, _LANES), out_dtype),
                   jax.ShapeDtypeStruct((rows, _LANES), out_dtype)),
        grid=(rows // tb,),
        in_specs=[blk] * n_in,
        out_specs=(blk, blk),
        compiler_params=pltpu.CompilerParams(dimension_semantics=("parallel",)),
    )(*inputs)

    act = act2d.reshape(-1)[:n].reshape(orig_shape)
    logp = logp2d.reshape(-1)[:n].reshape(orig_shape)
    return act, logp, {}


# --------------------------------------------------------------------------------------
# Pure-JAX reference (mirrors the PyTorch module) + robust correctness checks.
# --------------------------------------------------------------------------------------
def _reference(mean, std, eps, deterministic=False, minimal_std=0.001):
    std_p = _softplus(std) + minimal_std
    if deterministic:
        action = mean
        normal_lp = jnp.ones_like(mean)
    else:
        action = mean + std_p * eps
        normal_lp = (-((action - mean) ** 2) / (2.0 * std_p ** 2)
                     - jnp.log(std_p) - _HALF_LOG_2PI)
    t = jnp.tanh(action)
    real_logp = normal_lp - jnp.log(1.0 - t ** 2 + 1e-7)
    return t, real_logp, normal_lp


def _check(act, logp, mean, std, eps, deterministic):
    ref_act, _, normal_lp = _reference(mean, std, eps, deterministic)
    assert act.shape == mean.shape and logp.shape == mean.shape
    assert bool(jnp.all(jnp.isfinite(act))) and bool(jnp.all(jnp.isfinite(logp)))
    # 1) squashed action matches tanh(mean + std'*eps)
    assert jnp.allclose(act, ref_act, atol=1e-5, rtol=1e-5)
    # 2) log-prob: undo the tanh-volume correction using the kernel's OWN action, so the
    #    comparison is not sensitive to ulp-level tanh differences that log(1 - t^2)
    #    amplifies near saturation. What remains must equal the Normal log-prob
    #    (or the constant 1 in the deterministic path).
    recovered = (logp.astype(jnp.float32)
                 + jnp.log(1.0 - act.astype(jnp.float32) ** 2 + 1e-7))
    assert jnp.allclose(recovered, normal_lp, atol=1e-3, rtol=1e-3)


if __name__ == "__main__":
    key = jax.random.PRNGKey(0)
    k_mean, k_std, k_eps = jax.random.split(key, 3)

    # small shapes consistent with a policy head: batch=16, action_dim=32
    B, D = 16, 32
    mean = jax.random.normal(k_mean, (B, D), dtype=jnp.float32)
    std = jax.random.normal(k_std, (B, D), dtype=jnp.float32)
    eps = jax.random.normal(k_eps, (B, D), dtype=jnp.float32)  # same key/shape as wrapper

    # --- stochastic path ---
    act, logp, stats = tanh_gaussian_forward(mean, std, key=k_eps, deterministic=False)
    jax.block_until_ready((act, logp))
    assert stats == {}
    _check(act, logp, mean, std, eps, deterministic=False)

    # --- deterministic path (mean-only kernel) ---
    act_d, logp_d, _ = tanh_gaussian_forward(mean, std, deterministic=True)
    jax.block_until_ready((act_d, logp_d))
    _check(act_d, logp_d, mean, std, eps, deterministic=True)

    # --- second shape exercising the pad-free lane-dense path (B*D == 1024) ---
    k2m, k2s, k2e = jax.random.split(jax.random.PRNGKey(1), 3)
    mean2 = jax.random.normal(k2m, (8, 128), dtype=jnp.float32)
    std2 = jax.random.normal(k2s, (8, 128), dtype=jnp.float32)
    eps2 = jax.random.normal(k2e, (8, 128), dtype=jnp.float32)
    act2, logp2, _ = tanh_gaussian_forward(mean2, std2, key=k2e, deterministic=False)
    jax.block_until_ready((act2, logp2))
    _check(act2, logp2, mean2, std2, eps2, deterministic=False)

    print("KERNEL_OK")
</pallas_src>

<mosaic_0001>
module attributes {stable_mosaic.version = 11 : i64} {
  func.func @_stochastic_kernel(%arg0: i32, %arg1: memref<1x1024xf32, #tpu.memory_space<vmem>>, %arg2: memref<1x1024xf32, #tpu.memory_space<vmem>>, %arg3: memref<1x1024xf32, #tpu.memory_space<vmem>>, %arg4: memref<1x1024xf32, #tpu.memory_space<vmem>>, %arg5: memref<1x1024xf32, #tpu.memory_space<vmem>>) attributes {dimension_semantics = [#tpu.dimension_semantics<parallel>], iteration_bounds = array<i64: 1>, scalar_prefetch = 0 : i64, scratch_operands = 0 : i64, tpu.core_type = #tpu.core_type<tc>, window_params = [{transform_indices = @transform_0, window_bounds = array<i64: 1, 1024>}, {transform_indices = @transform_1, window_bounds = array<i64: 1, 1024>}, {transform_indices = @transform_2, window_bounds = array<i64: 1, 1024>}, {transform_indices = @transform_3, window_bounds = array<i64: 1, 1024>}, {transform_indices = @transform_4, window_bounds = array<i64: 1, 1024>}]} {
    %c0 = arith.constant 0 : index
    %c0_0 = arith.constant 0 : index
    %0 = vector.load %arg1[%c0, %c0_0] : memref<1x1024xf32, #tpu.memory_space<vmem>>, vector<1x1024xf32>
    %c0_1 = arith.constant 0 : index
    %c0_2 = arith.constant 0 : index
    %1 = vector.load %arg2[%c0_1, %c0_2] : memref<1x1024xf32, #tpu.memory_space<vmem>>, vector<1x1024xf32>
    %c0_3 = arith.constant 0 : index
    %c0_4 = arith.constant 0 : index
    %2 = vector.load %arg3[%c0_3, %c0_4] : memref<1x1024xf32, #tpu.memory_space<vmem>>, vector<1x1024xf32>
    %cst = arith.constant 0.000000e+00 : f32
    %3 = vector.broadcast %cst : f32 to vector<1x1024xf32>
    %4 = arith.maximumf %1, %3 : vector<1x1024xf32>
    %5 = math.absf %1 : vector<1x1024xf32>
    %cst_5 = arith.constant 0.000000e+00 : f32
    %6 = vector.broadcast %cst_5 : f32 to vector<1x1024xf32>
    %7 = arith.subf %6, %5 : vector<1x1024xf32>
    %8 = math.exp %7 : vector<1x1024xf32>
    %9 = math.log1p %8 : vector<1x1024xf32>
    %10 = arith.addf %4, %9 : vector<1x1024xf32>
    %cst_6 = arith.constant 1.000000e-03 : f32
    %11 = vector.broadcast %cst_6 : f32 to vector<1x1024xf32>
    %12 = arith.addf %10, %11 : vector<1x1024xf32>
    %13 = arith.mulf %12, %2 : vector<1x1024xf32>
    %14 = arith.addf %0, %13 : vector<1x1024xf32>
    %15 = arith.subf %14, %0 : vector<1x1024xf32>
    %16 = math.tanh %14 : vector<1x1024xf32>
    %17 = arith.mulf %15, %15 : vector<1x1024xf32>
    %cst_7 = arith.constant 0.000000e+00 : f32
    %18 = vector.broadcast %cst_7 : f32 to vector<1x1024xf32>
    %19 = arith.subf %18, %17 : vector<1x1024xf32>
    %cst_8 = arith.constant 2.000000e+00 : f32
    %20 = vector.broadcast %cst_8 : f32 to vector<1x1024xf32>
    %21 = arith.mulf %20, %12 : vector<1x1024xf32>
    %22 = arith.mulf %21, %12 : vector<1x1024xf32>
    %23 = arith.divf %19, %22 : vector<1x1024xf32>
    %cst_9 = arith.constant 0.918938517 : f32
    %24 = vector.broadcast %cst_9 : f32 to vector<1x1024xf32>
    %25 = arith.subf %23, %24 : vector<1x1024xf32>
    %26 = arith.mulf %16, %16 : vector<1x1024xf32>
    %cst_10 = arith.constant 1.000000e+00 : f32
    %27 = vector.broadcast %cst_10 : f32 to vector<1x1024xf32>
    %28 = arith.subf %27, %26 : vector<1x1024xf32>
    %cst_11 = arith.constant 1.000000e-07 : f32
    %29 = vector.broadcast %cst_11 : f32 to vector<1x1024xf32>
    %30 = arith.addf %28, %29 : vector<1x1024xf32>
    %31 = arith.mulf %12, %30 : vector<1x1024xf32>
    %32 = math.log %31 : vector<1x1024xf32>
    %33 = arith.subf %25, %32 : vector<1x1024xf32>
    %c0_12 = arith.constant 0 : index
    %c0_13 = arith.constant 0 : index
    %34 = vector.load %arg4[%c0_12, %c0_13] : memref<1x1024xf32, #tpu.memory_space<vmem>>, vector<1x1024xf32>
    tpu.vector_store %arg4[%c0_12, %c0_13], %16 {strides = array<i32>} : memref<1x1024xf32, #tpu.memory_space<vmem>>, vector<1x1024xf32>,
    %c0_14 = arith.constant 0 : index
    %c0_15 = arith.constant 0 : index
    %35 = vector.load %arg5[%c0_14, %c0_15] : memref<1x1024xf32, #tpu.memory_space<vmem>>, vector<1x1024xf32>
    tpu.vector_store %arg5[%c0_14, %c0_15], %33 {strides = array<i32>} : memref<1x1024xf32, #tpu.memory_space<vmem>>, vector<1x1024xf32>,
    return
  }
  func.func @transform_0(%arg0: i32) -> (i32, i32) {
    %c0_i32 = arith.constant 0 : i32
    %c0_i32_0 = arith.constant 0 : i32
    return %arg0, %c0_i32 : i32, i32
  }
  func.func @transform_1(%arg0: i32) -> (i32, i32) {
    %c0_i32 = arith.constant 0 : i32
    %c0_i32_0 = arith.constant 0 : i32
    return %arg0, %c0_i32 : i32, i32
  }
  func.func @transform_2(%arg0: i32) -> (i32, i32) {
    %c0_i32 = arith.constant 0 : i32
    %c0_i32_0 = arith.constant 0 : i32
    return %arg0, %c0_i32 : i32, i32
  }
  func.func @transform_3(%arg0: i32) -> (i32, i32) {
    %c0_i32 = arith.constant 0 : i32
    %c0_i32_0 = arith.constant 0 : i32
    return %arg0, %c0_i32 : i32, i32
  }
  func.func @transform_4(%arg0: i32) -> (i32, i32) {
    %c0_i32 = arith.constant 0 : i32
    %c0_i32_0 = arith.constant 0 : i32
    return %arg0, %c0_i32 : i32, i32
  }
}

</mosaic_0001>

<llo_original>
// kernel: tpu_custom_call.1
$region0: #{tpu_custom_call.1}
  #allocation0 [shape = 'u32[]', space=smem, size = 0x4, offset = 0x4, fixed_abs, tag = 'smem constant byte address 0x4 - core index']
  #allocation1 [shape = 'u32[144,128]{1,0:T(1,128)}', space=vmem, size = 0x12000, scoped, tag = 'internal scratch']
  %s0 = inlined_call_operand.hbm [shape: f32[1,1024], index: 0, kind: input, shape index: {}]
  %s1 = inlined_call_operand.hbm [shape: f32[1,1024], index: 1, kind: input, shape index: {}]
  %s2 = inlined_call_operand.hbm [shape: f32[1,1024], index: 2, kind: input, shape index: {}]
  %s3 = inlined_call_operand.hbm [shape: f32[1,1024], index: 3, kind: output, shape index: {0}]
  %s4 = inlined_call_operand.hbm [shape: f32[1,1024], index: 4, kind: output, shape index: {1}]
  %5 = xla_tuple %s3, %s4
  %s6 = sld [smem:[#allocation0]]
  $region42: #{tpu_custom_call.1} parent=0
    _
  %s8 = ssub.s32 1, %s6
  %s9 = scalar_select 0, %s8, %s6
  $region1: #{tpu_custom_call.1} parent=0
    #allocation2 [shape = 'u8[4096]{0}', space=vmem, size = 0x1000, scoped, tag = 'input window, operand 0, single buffered']
    #allocation3 [shape = 's32[1]{0}', space=sflag, size = 0x4, scoped, tag = 'scoped memory for tpu_custom_call.1']
    #allocation4 [shape = 's32[1]{0}', space=sflag, size = 0x4, scoped, tag = 'scoped memory for tpu_custom_call.1']
    #allocation5 [shape = 'u8[4096]{0}', space=vmem, size = 0x1000, scoped, tag = 'input window, operand 1, single buffered']
    #allocation6 [shape = 's32[1]{0}', space=sflag, size = 0x4, scoped, tag = 'scoped memory for tpu_custom_call.1']
    #allocation7 [shape = 'u8[4096]{0}', space=vmem, size = 0x1000, scoped, tag = 'input window, operand 2, single buffered']
    #allocation8 [shape = 'u8[4096]{0}', space=vmem, size = 0x1000, scoped, tag = 'output window, operand 0, single buffered']
    #allocation9 [shape = 'u8[4096]{0}', space=vmem, size = 0x1000, scoped, tag = 'output window, operand 1, single buffered']
    #allocation10 [shape = 's32[1]{0}', space=sflag, size = 0x4, scoped, tag = 'scoped memory for tpu_custom_call.1']
    %10 = vsyncpa [#allocation3], 0
    %11 = vsyncpa [#allocation6], 0
    %12 = vsyncpa [#allocation4], 0
    %13 = vsyncpa [#allocation10], 0
    // Predicated region
    $region2: #{tpu_custom_call.1} parent=1 // pred_check
      _
    $region3: #{tpu_custom_call.1} parent=1 // pred_check_branch
      %15 = sbr.rel (0) target = $region5
    $region4: #{tpu_custom_call.1} parent=1 // pred_region
      %s17 = ssub.s32 128, 128
      %18 = vsyncadd [#allocation3], %s17
      %s20 = sshll.u32 [#allocation2], 4
      %s21 = int_to_ptr.vmem [resolvable:$true] %s20
      %23 = dma.hbm_to_vmem [thread:$0]  %s0, 128, %s21, [#allocation3]
    $region5: #{tpu_custom_call.1} parent=1 // pred_fallthru
      _
    // Predicated region
    $region6: #{tpu_custom_call.1} parent=1 // pred_check
      _
    $region7: #{tpu_custom_call.1} parent=1 // pred_check_branch
      %25 = sbr.rel (0) target = $region9
    $region8: #{tpu_custom_call.1} parent=1 // pred_region
      %s27 = ssub.s32 128, 128
      %28 = vsyncadd [#allocation6], %s27
      %s30 = sshll.u32 [#allocation5], 4
      %s31 = int_to_ptr.vmem [resolvable:$true] %s30
      %33 = dma.hbm_to_vmem [thread:$0]  %s1, 128, %s31, [#allocation6]
    $region9: #{tpu_custom_call.1} parent=1 // pred_fallthru
      _
    // Predicated region
    $region10: #{tpu_custom_call.1} parent=1 // pred_check
      _
    $region11: #{tpu_custom_call.1} parent=1 // pred_check_branch
      %35 = sbr.rel (0) target = $region13
    $region12: #{tpu_custom_call.1} parent=1 // pred_region
      %s37 = ssub.s32 128, 128
      %38 = vsyncadd [#allocation6], %s37
      %s40 = sshll.u32 [#allocation7], 4
      %s41 = int_to_ptr.vmem [resolvable:$true] %s40
      %43 = dma.hbm_to_vmem [thread:$0]  %s2, 128, %s41, [#allocation6]
    $region13: #{tpu_custom_call.1} parent=1 // pred_fallthru
      _
    // Predicated region
    $region14: #{tpu_custom_call.1} parent=1 // pred_check
      _
    $region15: #{tpu_custom_call.1} parent=1 // pred_check_branch
      %45 = sbr.rel (0) target = $region17
    $region16: #{tpu_custom_call.1} parent=1 // pred_region
      %46 = dma.done [#allocation3], 128
    $region17: #{tpu_custom_call.1} parent=1 // pred_fallthru
      _
    // Predicated region
    $region18: #{tpu_custom_call.1} parent=1 // pred_check
      _
    $region19: #{tpu_custom_call.1} parent=1 // pred_check_branch
      %48 = sbr.rel (0) target = $region21
    $region20: #{tpu_custom_call.1} parent=1 // pred_region
      %49 = dma.done [#allocation6], 128
    $region21: #{tpu_custom_call.1} parent=1 // pred_fallthru
      _
    // Predicated region
    $region22: #{tpu_custom_call.1} parent=1 // pred_check
      _
    $region23: #{tpu_custom_call.1} parent=1 // pred_check_branch
      %51 = sbr.rel (0) target = $region25
    $region24: #{tpu_custom_call.1} parent=1 // pred_region
      %52 = dma.done [#allocation6], 128
    $region25: #{tpu_custom_call.1} parent=1 // pred_fallthru
      _
    %v53 = vld [vmem:[#allocation2] sm:$0xff]
    %v54 = vld [vmem:[#allocation5] sm:$0xff]
    %v55 = vld [vmem:[#allocation7] sm:$0xff]
    %v56 = vmax.f32 %v54, 0.0
    %v57 = vand.u32 2147483647, %v54
    %v58 = vsub.f32 0.0, %v57
    %v59 = vmul.f32 %v58, 1.442695
    %v60 = vpow.pop %v59
    %v61 = vadd.f32 %v60, 1.0
    %v62 = vlog2.pop %v61
    %v63 = vmul.f32 %v62, 0.6931472
    %v64 = vmul.f32 -0.5, %v60
    %v65 = vadd.f32 %v64, 1.0
    %v66 = vmul.f32 %v65, %v60
    %v67 = vand.u32 2147483647, %v60
    %vm68 = vcmp.lt.f32.partialorder %v67, 0.0004427343
    %v69 = vsel %vm68, %v66, %v63
    %v70 = vadd.f32 %v56, %v69
    %v71 = vadd.f32 %v70, 0.001
    %v72 = vmul.f32 %v71, %v55
    %v73 = vadd.f32 %v53, %v72
    %v74 = vsub.f32 %v73, %v53
    %v75 = vtanh.pop %v73
    %v76 = vmul.f32 %v74, %v74
    %v77 = vsub.f32 0.0, %v76
    %v78 = vmul.f32 %v71, 2.0
    %v79 = vmul.f32 %v78, %v71
    %v80 = vrcp.pop %v79
    %v81 = vmul.f32 %v77, %v80
    %v82 = vsub.f32 %v81, 0.9189385
    %v83 = vmul.f32 %v75, %v75
    %v84 = vsub.f32 1.0, %v83
    %v85 = vadd.f32 %v84, 1e-07
    %v86 = vmul.f32 %v71, %v85
    %v87 = vlog2.pop %v86
    %v88 = vmul.f32 %v87, 0.6931472
    %v89 = vsub.f32 %v82, %v88
    %90 = vst [vmem:[#allocation8] sm:$0xff] %v75
    %91 = vst [vmem:[#allocation9] sm:$0xff] %v89
    // Predicated region
    $region26: #{tpu_custom_call.1} parent=1 // pred_check
      _
    $region27: #{tpu_custom_call.1} parent=1 // pred_check_branch
      %93 = sbr.rel (0) target = $region29
    $region28: #{tpu_custom_call.1} parent=1 // pred_region
      %s95 = ssub.s32 128, 128
      %96 = vsyncadd [#allocation4], %s95
      %s98 = sshll.u32 [#allocation8], 4
      %s99 = int_to_ptr.vmem [resolvable:$true] %s98
      %101 = dma.vmem_to_hbm [thread:$0]  %s99, 128, %s3, [#allocation4]
    $region29: #{tpu_custom_call.1} parent=1 // pred_fallthru
      _
    // Predicated region
    $region30: #{tpu_custom_call.1} parent=1 // pred_check
      _
    $region31: #{tpu_custom_call.1} parent=1 // pred_check_branch
      %103 = sbr.rel (0) target = $region33
    $region32: #{tpu_custom_call.1} parent=1 // pred_region
      %s105 = ssub.s32 128, 128
      %106 = vsyncadd [#allocation10], %s105
      %s108 = sshll.u32 [#allocation9], 4
      %s109 = int_to_ptr.vmem [resolvable:$true] %s108
      %111 = dma.vmem_to_hbm [thread:$0]  %s109, 128, %s4, [#allocation10]
    $region33: #{tpu_custom_call.1} parent=1 // pred_fallthru
      _
    // Predicated region
    $region34: #{tpu_custom_call.1} parent=1 // pred_check
      _
    $region35: #{tpu_custom_call.1} parent=1 // pred_check_branch
      %113 = sbr.rel (0) target = $region37
    $region36: #{tpu_custom_call.1} parent=1 // pred_region
      %114 = dma.done [#allocation4], 128
    $region37: #{tpu_custom_call.1} parent=1 // pred_fallthru
      _
    // Predicated region
    $region38: #{tpu_custom_call.1} parent=1 // pred_check
      _
    $region39: #{tpu_custom_call.1} parent=1 // pred_check_branch
      %116 = sbr.rel (0) target = $region41
    $region40: #{tpu_custom_call.1} parent=1 // pred_region
      %117 = dma.done [#allocation10], 128
    $region41: #{tpu_custom_call.1} parent=1 // pred_fallthru
      _
    %118 = vsyncpa [#allocation3], 1
    %119 = vsyncpa [#allocation6], 1
    %120 = vsyncpa [#allocation4], 1
    %121 = vsyncpa [#allocation10], 1

</llo_original>
